<compile_context>
chip_gen: v6e
topology: v6e:2x2x1
jax: 0.10.0
libtpu: 0.0.40
codegen_flags: <defaults>
</compile_context>

<pallas_src>
import math

import jax
import jax.numpy as jnp
from jax.experimental import pallas as pl
from jax.experimental.pallas import tpu as pltpu

_LANE = 128
_SUBLANE = 8
_DEFAULT_VMEM_LIMIT = 32 * 1024 * 1024   # safe scoped-VMEM ask on v5e/v6e/v7x
_MAX_VMEM_LIMIT = 64 * 1024 * 1024       # only reached on 128-MiB-VMEM parts
_WORKING_SET_BUDGET = 24 * 1024 * 1024   # 6 double-buffered blocks under the ask
_TARGET_BLOCK_BYTES = 2 * 1024 * 1024    # ~2 MiB blocks: HBM-roofline sweet spot
_TINY_BYTES = 512 * 1024                 # below this, one block / one grid step


def _build_pe_table(embed_dim: int, max_len: int) -> jnp.ndarray:
    """Deterministic sinusoidal PE buffer, matching the PyTorch __init__."""
    position = jnp.arange(max_len, dtype=jnp.float32)[:, None]             # (max_len, 1)
    div_term = jnp.exp(
        jnp.arange(0, embed_dim, 2, dtype=jnp.float32)
        * (-math.log(10000.0) / embed_dim)
    )                                                                       # (ceil(E/2),)
    pe = jnp.zeros((max_len, embed_dim), dtype=jnp.float32)
    sin_part = jnp.sin(position * div_term)
    cos_part = jnp.cos(position * div_term)
    if embed_dim % 2 == 0:
        pe = pe.at[:, 0::2].set(sin_part)
        pe = pe.at[:, 1::2].set(cos_part)
    else:
        pe = pe.at[:, 0::2].set(sin_part)
        if embed_dim > 1:
            pe = pe.at[:, 1::2].set(cos_part[:, :-1])
    return pe[None]                                                         # (1, max_len, E)


def init_positional_encoding(embed_dim: int, max_len: int = 2048) -> dict:
    """Parameter setup: build pe and (if useful) cache its lane-dense repack."""
    pe = _build_pe_table(embed_dim, max_len)
    pe_flat = None
    if embed_dim % _LANE != 0 and (max_len * embed_dim) % _LANE == 0:
        # Cached once at setup: a row-major flatten, so the first S*E/128 rows
        # of pe_flat are exactly pe[:, :S, :] for any S with S*E % 128 == 0.
        pe_flat = pe.reshape(1, (max_len * embed_dim) // _LANE, _LANE)
    return {"pe": pe, "pe_flat": pe_flat}


def _pe_add_kernel(x_ref, pe_ref, o_ref):
    # Tiled path: all refs are (TS, L) — straight vld / vadd / vst.
    # Tiny path: x_ref/o_ref are (B, R, L), pe_ref is (1, R, L); the leading-dim
    # broadcast reuses the same vregs (no lane/sublane shuffle).
    o_ref[...] = x_ref[...] + pe_ref[...]


def _pick_row_tile(rows: int, lanes: int, itemsize: int) -> int:
    """Pick a ~2 MiB sequence tile whose double-buffered set fits the budget."""
    per_row = lanes * itemsize
    cap = max(_SUBLANE, _WORKING_SET_BUDGET // (6 * per_row))     # 6 live buffers
    target = max(_SUBLANE, _TARGET_BLOCK_BYTES // per_row)
    ts = min(rows, cap, target)
    ts = max(_SUBLANE, (ts // _SUBLANE) * _SUBLANE)
    if rows % ts == 0:
        return ts
    # Prefer an even divisor of rows, but only if it stays >= ts // 2: a ragged
    # final block (which Pallas masks) is far cheaper than a collapsed tile.
    floor = max(_SUBLANE, ts // 2)
    t = ts - _SUBLANE
    while t >= floor:
        if rows % t == 0:
            return t
        t -= _SUBLANE
    return ts


def _vmem_limit_bytes() -> int:
    """32 MiB everywhere; 64 MiB on 128-MiB-VMEM parts (v5e/v6e), never on v7x."""
    limit = _DEFAULT_VMEM_LIMIT
    try:
        cap = getattr(pltpu.get_tpu_info(), "vmem_capacity_bytes", None)
        if cap:
            limit = min(max(cap // 2, limit), _MAX_VMEM_LIMIT)
    except Exception:
        pass
    return limit


def positional_encoding_forward(x: jnp.ndarray, params: dict) -> jnp.ndarray:
    """x: (B, S, E) -> (B, S, E) == x + pe[:, :S]."""
    pe = params["pe"]
    pe_flat = params.get("pe_flat")
    B, S, E = x.shape
    assert S <= pe.shape[1], "sequence length exceeds max_len"
    out_dtype = jnp.result_type(x.dtype, pe.dtype)
    itemsize = jnp.dtype(out_dtype).itemsize

    # --- layout: present a lane-dense (multiple-of-128) last dim when possible ---
    if pe_flat is not None and (S * E) % _LANE == 0:
        L = _LANE
        R = (S * E) // L
        x_k = x.reshape(B, R, L)     # contiguous split/merge of trailing dims
        pe_k = pe_flat               # cached at setup; BlockSpec selects rows
    else:
        L, R = E, S
        x_k = x
        pe_k = pe                    # full (1, max_len, E); BlockSpec selects rows

    vmem_limit = _vmem_limit_bytes()
    total_bytes = B * R * L * itemsize
    cost = pl.CostEstimate(
        flops=B * S * E,
        transcendentals=0,
        # read x, write out, read pe once per sequence tile (not per batch)
        bytes_accessed=(2 * B * R * L + R * L) * itemsize,
    )

    if total_bytes <= _TINY_BYTES:
        # Truly tiny problem: one block, one grid step — avoid per-step overhead.
        if R % _SUBLANE == 0 or R == pe_k.shape[1]:
            pe_tiny = pe_k           # block shape legal against the full buffer
        else:
            pe_tiny = pe_k[:, :R, :]  # tiny slice so the block equals full dims
        out = pl.pallas_call(
            _pe_add_kernel,
            out_shape=jax.ShapeDtypeStruct((B, R, L), out_dtype),
            grid_spec=pltpu.PrefetchScalarGridSpec(
                num_scalar_prefetch=0,
                grid=(1,),
                in_specs=[
                    pl.BlockSpec((B, R, L), lambda i: (0, 0, 0)),
                    pl.BlockSpec((1, R, L), lambda i: (0, 0, 0)),
                ],
                out_specs=pl.BlockSpec((B, R, L), lambda i: (0, 0, 0)),
            ),
            compiler_params=pltpu.CompilerParams(
                dimension_semantics=("arbitrary",),
                vmem_limit_bytes=vmem_limit,
            ),
            cost_estimate=cost,
        )(x_k, pe_tiny)
    else:
        ts = _pick_row_tile(R, L, itemsize)
        n_row_tiles = pl.cdiv(R, ts)
        out = pl.pallas_call(
            _pe_add_kernel,
            out_shape=jax.ShapeDtypeStruct((B, R, L), out_dtype),
            grid_spec=pltpu.PrefetchScalarGridSpec(
                num_scalar_prefetch=0,
                # Batch is the fastest-varying grid axis, so pe's block index
                # (0, s, 0) repeats across consecutive steps and the resident
                # pe tile is reused instead of re-DMA'd (S//TS fetches, not
                # B * S//TS).
                grid=(n_row_tiles, B),
                in_specs=[
                    pl.BlockSpec((pl.Squeezed(), ts, L), lambda s, b: (b, s, 0)),
                    pl.BlockSpec((pl.Squeezed(), ts, L), lambda s, b: (0, s, 0)),
                ],
                out_specs=pl.BlockSpec((pl.Squeezed(), ts, L), lambda s, b: (b, s, 0)),
            ),
            compiler_params=pltpu.CompilerParams(
                dimension_semantics=("parallel", "parallel"),
                vmem_limit_bytes=vmem_limit,
            ),
            cost_estimate=cost,
        )(x_k, pe_k)

    return out.reshape(B, S, E)


if __name__ == "__main__":
    key = jax.random.PRNGKey(0)
    max_len = 2048

    # --- primary small test (E=32: lane-dense cached-pe, single-block path) ---
    B, S, E = 2, 8, 32
    x = jax.random.normal(key, (B, S, E), dtype=jnp.float32)
    params = init_positional_encoding(E, max_len)

    out = positional_encoding_forward(x, params)
    out = jax.block_until_ready(out)
    ref = x + params["pe"][:, :S]
    assert out.shape == (B, S, E)
    assert jnp.allclose(out, ref, atol=1e-6), "mismatch vs reference (small shape)"

    # --- secondary test (E%128==0: tiled, pe-resident, squeezed-batch path) ---
    B2, S2, E2 = 2, 2048, 256
    x2 = jax.random.normal(jax.random.PRNGKey(0), (B2, S2, E2), dtype=jnp.float32)
    params2 = init_positional_encoding(E2, max_len)

    out2 = positional_encoding_forward(x2, params2)
    out2 = jax.block_until_ready(out2)
    ref2 = x2 + params2["pe"][:, :S2]
    assert out2.shape == (B2, S2, E2)
    assert jnp.allclose(out2, ref2, atol=1e-6), "mismatch vs reference (tiled shape)"

    # --- third test (awkward length: cached lane-dense pe + ragged edge block) ---
    B3, S3, E3 = 2, 1000, 192
    x3 = jax.random.normal(jax.random.PRNGKey(0), (B3, S3, E3), dtype=jnp.float32)
    params3 = init_positional_encoding(E3, max_len)

    out3 = positional_encoding_forward(x3, params3)
    out3 = jax.block_until_ready(out3)
    ref3 = x3 + params3["pe"][:, :S3]
    assert out3.shape == (B3, S3, E3)
    assert jnp.allclose(out3, ref3, atol=1e-6), "mismatch vs reference (ragged shape)"

    print("KERNEL_OK")
</pallas_src>

<mosaic_0001>
module attributes {stable_mosaic.version = 11 : i64} {
  func.func @_pe_add_kernel(%arg0: i32, %arg1: memref<2x2x128xf32, #tpu.memory_space<vmem>>, %arg2: memref<1x2x128xf32, #tpu.memory_space<vmem>>, %arg3: memref<2x2x128xf32, #tpu.memory_space<vmem>>) attributes {dimension_semantics = [#tpu.dimension_semantics<arbitrary>], iteration_bounds = array<i64: 1>, scalar_prefetch = 0 : i64, scratch_operands = 0 : i64, tpu.core_type = #tpu.core_type<tc>, window_params = [{pipeline_mode = #tpu.pipeline_mode<synchronous>, transform_indices = @transform_0, window_bounds = array<i64: 2, 2, 128>}, {pipeline_mode = #tpu.pipeline_mode<synchronous>, transform_indices = @transform_1, window_bounds = array<i64: 1, 2, 128>}, {pipeline_mode = #tpu.pipeline_mode<synchronous>, transform_indices = @transform_2, window_bounds = array<i64: 2, 2, 128>}]} {
    %c0 = arith.constant 0 : index
    %c0_0 = arith.constant 0 : index
    %c0_1 = arith.constant 0 : index
    %0 = vector.load %arg1[%c0, %c0_0, %c0_1] : memref<2x2x128xf32, #tpu.memory_space<vmem>>, vector<2x2x128xf32>
    %c0_2 = arith.constant 0 : index
    %c0_3 = arith.constant 0 : index
    %c0_4 = arith.constant 0 : index
    %1 = vector.load %arg2[%c0_2, %c0_3, %c0_4] : memref<1x2x128xf32, #tpu.memory_space<vmem>>, vector<1x2x128xf32>
    %2 = vector.broadcast %1 : vector<1x2x128xf32> to vector<2x2x128xf32>
    %3 = arith.addf %0, %2 : vector<2x2x128xf32>
    %c0_5 = arith.constant 0 : index
    %c0_6 = arith.constant 0 : index
    %c0_7 = arith.constant 0 : index
    %4 = vector.load %arg3[%c0_5, %c0_6, %c0_7] : memref<2x2x128xf32, #tpu.memory_space<vmem>>, vector<2x2x128xf32>
    tpu.vector_store %arg3[%c0_5, %c0_6, %c0_7], %3 {strides = array<i32>} : memref<2x2x128xf32, #tpu.memory_space<vmem>>, vector<2x2x128xf32>,
    return
  }
  func.func @transform_0(%arg0: i32) -> (i32, i32, i32) {
    %c0_i32 = arith.constant 0 : i32
    %c0_i32_0 = arith.constant 0 : i32
    %c0_i32_1 = arith.constant 0 : i32
    %c0_i32_2 = arith.constant 0 : i32
    return %c0_i32, %c0_i32_0, %c0_i32_1 : i32, i32, i32
  }
  func.func @transform_1(%arg0: i32) -> (i32, i32, i32) {
    %c0_i32 = arith.constant 0 : i32
    %c0_i32_0 = arith.constant 0 : i32
    %c0_i32_1 = arith.constant 0 : i32
    %c0_i32_2 = arith.constant 0 : i32
    return %c0_i32, %c0_i32_0, %c0_i32_1 : i32, i32, i32
  }
  func.func @transform_2(%arg0: i32) -> (i32, i32, i32) {
    %c0_i32 = arith.constant 0 : i32
    %c0_i32_0 = arith.constant 0 : i32
    %c0_i32_1 = arith.constant 0 : i32
    %c0_i32_2 = arith.constant 0 : i32
    return %c0_i32, %c0_i32_0, %c0_i32_1 : i32, i32, i32
  }
}

</mosaic_0001>

<llo_original>
// kernel: tpu_custom_call.1
$region0: #{tpu_custom_call.1}
  #allocation0 [shape = 'u32[]', space=smem, size = 0x4, offset = 0x4, fixed_abs, tag = 'smem constant byte address 0x4 - core index']
  #allocation1 [shape = 'u32[144,128]{1,0:T(1,128)}', space=vmem, size = 0x12000, scoped, tag = 'internal scratch']
  %s0 = inlined_call_operand.hbm [shape: f32[2,2,128], index: 0, kind: input, shape index: {}]
  %s1 = inlined_call_operand.hbm [shape: f32[1,2,128], index: 1, kind: input, shape index: {}]
  %s2 = inlined_call_operand.hbm [shape: f32[2,2,128], index: 2, kind: output, shape index: {}]
  %s3 = sld [smem:[#allocation0]]
  $region26: #{tpu_custom_call.1} parent=0
    _
  %s5 = ssub.s32 1, %s3
  %s6 = scalar_select 0, %s5, %s3
  $region1: #{tpu_custom_call.1} parent=0
    #allocation2 [shape = 'u8[2048]{0}', space=vmem, size = 0x800, scoped, tag = 'input window, operand 0, single buffered']
    #allocation3 [shape = 's32[1]{0}', space=sflag, size = 0x4, scoped, tag = 'scoped memory for tpu_custom_call.1']
    #allocation4 [shape = 's32[1]{0}', space=sflag, size = 0x4, scoped, tag = 'scoped memory for tpu_custom_call.1']
    #allocation5 [shape = 'u8[1024]{0}', space=vmem, size = 0x400, scoped, tag = 'input window, operand 1, single buffered']
    #allocation6 [shape = 's32[1]{0}', space=sflag, size = 0x4, scoped, tag = 'scoped memory for tpu_custom_call.1']
    #allocation7 [shape = 'u8[2048]{0}', space=vmem, size = 0x800, scoped, tag = 'output window, operand 0, single buffered']
    %7 = vsyncpa [#allocation3], 0
    %8 = vsyncpa [#allocation6], 0
    %9 = vsyncpa [#allocation4], 0
    // Predicated region
    $region2: #{tpu_custom_call.1} parent=1 // pred_check
      _
    $region3: #{tpu_custom_call.1} parent=1 // pred_check_branch
      %11 = sbr.rel (0) target = $region5
    $region4: #{tpu_custom_call.1} parent=1 // pred_region
      %s13 = ssub.s32 64, 64
      %14 = vsyncadd [#allocation3], %s13
      %s15 = sshll.u32 [#allocation2], 4
      %s16 = int_to_ptr.vmem [resolvable:$true] %s15
      %21 = dma.hbm_to_vmem [thread:$0]  %s0, 64, %s16, [#allocation3], 32, 32, 2
    $region5: #{tpu_custom_call.1} parent=1 // pred_fallthru
      _
    // Predicated region
    $region6: #{tpu_custom_call.1} parent=1 // pred_check
      _
    $region7: #{tpu_custom_call.1} parent=1 // pred_check_branch
      %23 = sbr.rel (0) target = $region9
    $region8: #{tpu_custom_call.1} parent=1 // pred_region
      %s25 = ssub.s32 32, 32
      %26 = vsyncadd [#allocation6], %s25
      %s28 = sshll.u32 [#allocation5], 4
      %s29 = int_to_ptr.vmem [resolvable:$true] %s28
      %31 = dma.hbm_to_vmem [thread:$0]  %s1, 32, %s29, [#allocation6]
    $region9: #{tpu_custom_call.1} parent=1 // pred_fallthru
      _
    // Predicated region
    $region10: #{tpu_custom_call.1} parent=1 // pred_check
      _
    $region11: #{tpu_custom_call.1} parent=1 // pred_check_branch
      %33 = sbr.rel (0) target = $region13
    $region12: #{tpu_custom_call.1} parent=1 // pred_region
      %34 = dma.done [#allocation3], 64
    $region13: #{tpu_custom_call.1} parent=1 // pred_fallthru
      _
    // Predicated region
    $region14: #{tpu_custom_call.1} parent=1 // pred_check
      _
    $region15: #{tpu_custom_call.1} parent=1 // pred_check_branch
      %36 = sbr.rel (0) target = $region17
    $region16: #{tpu_custom_call.1} parent=1 // pred_region
      %37 = dma.done [#allocation6], 32
    $region17: #{tpu_custom_call.1} parent=1 // pred_fallthru
      _
    %v38 = vld [vmem:[#allocation2] sm:$0x3]
    %v39 = vld [vmem:[#allocation2 + $0x2] sm:$0x3]
    %v40 = vld [vmem:[#allocation5] sm:$0x3]
    %v41 = vadd.f32 %v38, %v40
    %v42 = vadd.f32 %v39, %v40
    %43 = vst [vmem:[#allocation7] sm:$0x3] %v41
    %44 = vst [vmem:[#allocation7 + $0x2] sm:$0x3] %v42
    // Predicated region
    $region18: #{tpu_custom_call.1} parent=1 // pred_check
      _
    $region19: #{tpu_custom_call.1} parent=1 // pred_check_branch
      %46 = sbr.rel (0) target = $region21
    $region20: #{tpu_custom_call.1} parent=1 // pred_region
      %s48 = ssub.s32 64, 64
      %49 = vsyncadd [#allocation4], %s48
      %s50 = sshll.u32 [#allocation7], 4
      %s51 = int_to_ptr.vmem [resolvable:$true] %s50
      %56 = dma.vmem_to_hbm [thread:$0]  %s51, 64, %s2, [#allocation4], 32, 32, 2
    $region21: #{tpu_custom_call.1} parent=1 // pred_fallthru
      _
    // Predicated region
    $region22: #{tpu_custom_call.1} parent=1 // pred_check
      _
    $region23: #{tpu_custom_call.1} parent=1 // pred_check_branch
      %58 = sbr.rel (0) target = $region25
    $region24: #{tpu_custom_call.1} parent=1 // pred_region
      %59 = dma.done [#allocation4], 64
    $region25: #{tpu_custom_call.1} parent=1 // pred_fallthru
      _
    %60 = vsyncpa [#allocation3], 1
    %61 = vsyncpa [#allocation6], 1
    %62 = vsyncpa [#allocation4], 1

</llo_original>
